<compile_context>
chip_gen: v5e
topology: v5e:2x2
jax: 0.10.0
libtpu: 0.0.40
codegen_flags: <defaults>
</compile_context>

<pallas_src>
import functools

import jax
import jax.numpy as jnp
from jax import lax
from jax.experimental import pallas as pl
from jax.experimental.pallas import tpu as pltpu

NORMALIZE = True   # cosine-similarity NT-Xent (default option). The fixed-shift
TAU = 1.0          # softmax trick in the kernel requires NORMALIZE=True.
EPS = 1e-8


def _pick_row_tile(n):
    """Largest multiple of 8 that divides the per-view data count, capped at 256.

    tm divides N, so a row block never straddles the two concatenated views and
    the positive-partner rows of a block are a single contiguous block.
    """
    best = 0
    t = 8
    while t <= min(n, 256):
        if n % t == 0:
            best = t
        t += 8
    if best == 0:
        # TODO(synk): pad the batch to a multiple of 8 instead of bailing out.
        raise ValueError(f"data_count={n} must be a multiple of 8")
    return best


def _cocsr_loss_kernel(p_ref, s_ref, oh_ref, out_ref, acc_c_ref, acc_a_ref,
                       *, lambda_contrastive, lambda_aug_cls):
    i = pl.program_id(0)
    n_blocks = pl.num_programs(0)
    n2 = p_ref.shape[0]
    n = n2 // 2
    tm = s_ref.shape[0]

    @pl.when(i == 0)
    def _init():
        acc_c_ref[...] = jnp.zeros_like(acc_c_ref)
        acc_a_ref[...] = jnp.zeros_like(acc_a_ref)

    # ---------------- NT-Xent contribution of this row block ----------------
    r0 = pl.multiple_of(i * tm, tm)
    rows = p_ref[pl.ds(r0, tm), :]                           # bf16 [tm, D], unit rows
    # positive partner of row r is row (r + N) mod 2N; tm | N so the partner
    # rows of a block form one contiguous block.
    pos_start = pl.multiple_of(jnp.where(r0 < n, r0 + n, r0 - n), tm)
    pos_rows = p_ref[pl.ds(pos_start, tm), :]                # bf16 [tm, D]

    # [tm, 2N] cosine-similarity stripe on the MXU (bf16 operands, f32 acc).
    sim = lax.dot_general(rows, p_ref[...],
                          dimension_numbers=(((1,), (1,)), ((), ())),
                          preferred_element_type=jnp.float32) * (1.0 / TAU)

    # Rows are unit-norm => sim <= 1/tau and diag(sim) == 1/tau.  Use the fixed
    # shift m = 1/tau and drop the self-similarity term as exp(0) == 1
    # (no diag mask, no per-row max reduce).
    m = jnp.float32(1.0 / TAU)
    denom = jnp.sum(jnp.exp(sim - m), axis=1, keepdims=True) - 1.0   # [tm, 1]
    lse = m + jnp.log(denom)                                         # [tm, 1]

    pos = jnp.sum(rows.astype(jnp.float32) * pos_rows.astype(jnp.float32),
                  axis=1, keepdims=True) * (1.0 / TAU)               # [tm, 1]
    acc_c_ref[...] += jnp.sum(lse - pos, keepdims=True)              # (1, 1)

    # ------------- augmentation-classification CE contribution --------------
    logits = s_ref[...]                                              # f32 [tm, A]
    lbl = jnp.sum(logits * oh_ref[...], axis=1, keepdims=True)
    mc = jnp.max(logits, axis=1, keepdims=True)
    lse_c = mc + jnp.log(jnp.sum(jnp.exp(logits - mc), axis=1, keepdims=True))
    acc_a_ref[...] += jnp.sum(lse_c - lbl, keepdims=True)            # (1, 1)

    # --------------- epilogue: write the 3 scalars exactly once -------------
    @pl.when(i == n_blocks - 1)
    def _finalize():
        inv = jnp.float32(1.0 / n2)
        c = acc_c_ref[...] * inv                                     # (1, 1)
        a = acc_a_ref[...] * inv                                     # (1, 1)
        total = lambda_contrastive * c + lambda_aug_cls * a
        out_ref[...] = jnp.concatenate([total, c, a], axis=1)        # (1, 3)


def cocsr_feature_learning_loss(aug_labels, z_i, z_j, s_i, s_j,
                                lambda_contrastive=1.0, lambda_aug_cls=1.0):
    """Forward pass with default options. Returns (total, contrastive, aug_cls)."""
    n, d = z_i.shape
    a = s_i.shape[1]
    n2 = 2 * n

    # XLA-side glue (one O(N*D) pass): concat the two views, L2-normalize the
    # projection rows (so the kernel's matmul yields cosine similarities
    # directly), cast to bf16 for the MXU, and one-hot the repeated labels.
    z = jnp.concatenate([z_i, z_j], axis=0).astype(jnp.float32)          # [2N, D]
    inv_norm = lax.rsqrt(jnp.maximum(jnp.sum(z * z, axis=1, keepdims=True),
                                     jnp.float32(EPS * EPS)))
    p_hat = (z * inv_norm).astype(jnp.bfloat16)                          # unit rows

    logits = jnp.concatenate([s_i, s_j], axis=0).astype(jnp.float32)     # [2N, A]
    labels = jnp.concatenate([aug_labels, aug_labels], axis=0)
    onehot = jax.nn.one_hot(labels, a, dtype=jnp.float32)                # [2N, A]

    tm = _pick_row_tile(n)
    grid = (n2 // tm,)

    kernel = functools.partial(_cocsr_loss_kernel,
                               lambda_contrastive=float(lambda_contrastive),
                               lambda_aug_cls=float(lambda_aug_cls))
    out = pl.pallas_call(
        kernel,
        out_shape=jax.ShapeDtypeStruct((1, 3), jnp.float32),
        grid_spec=pltpu.PrefetchScalarGridSpec(
            num_scalar_prefetch=0,
            grid=grid,
            in_specs=[
                # normalized projections: fully VMEM-resident across the grid
                pl.BlockSpec((n2, d), lambda i: (0, 0)),
                # aug-classification logits / one-hot labels: row stripes
                pl.BlockSpec((tm, a), lambda i: (i, 0)),
                pl.BlockSpec((tm, a), lambda i: (i, 0)),
            ],
            out_specs=pl.BlockSpec((1, 3), lambda i: (0, 0)),
            scratch_shapes=[pltpu.VMEM((1, 1), jnp.float32),   # sum(lse - pos)
                            pltpu.VMEM((1, 1), jnp.float32)],  # sum CE terms
        ),
        compiler_params=pltpu.CompilerParams(
            # The row-block axis carries the loss accumulators -> "arbitrary".
            # TODO(synk): for v7x (2 TCs) emit per-block partial sums, mark the
            # axis "parallel", and reduce the partials in the wrapper.
            dimension_semantics=("arbitrary",)),
    )(p_hat, logits, onehot)
    return out[0, 0], out[0, 1], out[0, 2]


# ---------------- pure-JAX reference for verification ----------------
def _reference(aug_labels, z_i, z_j, s_i, s_j):
    p = jnp.concatenate([z_i, z_j], axis=0).astype(jnp.float32)
    n2 = p.shape[0]
    n = n2 // 2
    sim = p @ p.T
    if NORMALIZE:
        nrm = jnp.linalg.norm(p, axis=1, keepdims=True)
        sim = sim / jnp.maximum(nrm * nrm.T, EPS)
    sim = sim / TAU
    idx = jnp.arange(n2)
    sim_masked = jnp.where(idx[:, None] == idx[None, :], -1e30, sim)
    pos = sim[idx, (idx + n) % n2]
    lse = jax.scipy.special.logsumexp(sim_masked, axis=1)
    contrastive = jnp.mean(lse - pos)

    logits = jnp.concatenate([s_i, s_j], axis=0).astype(jnp.float32)
    labels = jnp.concatenate([aug_labels, aug_labels], axis=0)
    lse_c = jax.scipy.special.logsumexp(logits, axis=1)
    ce = jnp.mean(lse_c - logits[jnp.arange(logits.shape[0]), labels])
    return contrastive + ce, contrastive, ce


if __name__ == "__main__":
    key = jax.random.PRNGKey(0)
    k1, k2, k3, k4, k5 = jax.random.split(key, 5)

    N, D, A = 8, 32, 4          # data count, feature size, #destructive aug types
    z_i = jax.random.normal(k1, (N, D), dtype=jnp.float32)
    z_j = jax.random.normal(k2, (N, D), dtype=jnp.float32)
    s_i = jax.random.normal(k3, (N, A), dtype=jnp.float32)
    s_j = jax.random.normal(k4, (N, A), dtype=jnp.float32)
    aug_labels = jax.random.randint(k5, (N,), 0, A, dtype=jnp.int32)

    total, contra, aug_cls = cocsr_feature_learning_loss(
        aug_labels, z_i, z_j, s_i, s_j)
    jax.block_until_ready(total)

    ref_total, ref_contra, ref_ce = _reference(aug_labels, z_i, z_j, s_i, s_j)
    # bf16 MXU operands: ~1e-3-level agreement expected (review note).
    assert jnp.allclose(total, ref_total, atol=2e-3, rtol=2e-3), (total, ref_total)
    assert jnp.allclose(contra, ref_contra, atol=2e-3, rtol=2e-3), (contra, ref_contra)
    assert jnp.allclose(aug_cls, ref_ce, atol=2e-3, rtol=2e-3), (aug_cls, ref_ce)

    print("KERNEL_OK")
</pallas_src>

<mosaic_0001>
module attributes {stable_mosaic.version = 11 : i64} {
  func.func @_cocsr_loss_kernel(%arg0: i32, %arg1: memref<16x32xbf16, #tpu.memory_space<vmem>>, %arg2: memref<8x4xf32, #tpu.memory_space<vmem>>, %arg3: memref<8x4xf32, #tpu.memory_space<vmem>>, %arg4: memref<1x3xf32, #tpu.memory_space<vmem>>, %arg5: memref<1x1xf32, #tpu.memory_space<vmem>>, %arg6: memref<1x1xf32, #tpu.memory_space<vmem>>) attributes {dimension_semantics = [#tpu.dimension_semantics<arbitrary>], iteration_bounds = array<i64: 2>, scalar_prefetch = 0 : i64, scratch_operands = 2 : i64, tpu.core_type = #tpu.core_type<tc>, window_params = [{pipeline_mode = #tpu.pipeline_mode<synchronous>, transform_indices = @transform_0, window_bounds = array<i64: 16, 32>}, {transform_indices = @transform_1, window_bounds = array<i64: 8, 4>}, {transform_indices = @transform_2, window_bounds = array<i64: 8, 4>}, {pipeline_mode = #tpu.pipeline_mode<synchronous>, transform_indices = @transform_3, window_bounds = array<i64: 1, 3>}]} {
    %c0_i32 = arith.constant 0 : i32
    %0 = arith.cmpi eq, %arg0, %c0_i32 : i32
    %1 = arith.extui %0 : i1 to i32
    %c0_i32_0 = arith.constant 0 : i32
    %2 = arith.cmpi ne, %1, %c0_i32_0 : i32
    scf.if %2 {
      %cst_32 = arith.constant 0.000000e+00 : f32
      %70 = vector.broadcast %cst_32 : f32 to vector<1x1xf32>
      %c0_33 = arith.constant 0 : index
      %c0_34 = arith.constant 0 : index
      %71 = vector.load %arg5[%c0_33, %c0_34] : memref<1x1xf32, #tpu.memory_space<vmem>>, vector<1x1xf32>
      tpu.vector_store %arg5[%c0_33, %c0_34], %70 {strides = array<i32>} : memref<1x1xf32, #tpu.memory_space<vmem>>, vector<1x1xf32>,
      %cst_35 = arith.constant 0.000000e+00 : f32
      %72 = vector.broadcast %cst_35 : f32 to vector<1x1xf32>
      %c0_36 = arith.constant 0 : index
      %c0_37 = arith.constant 0 : index
      %73 = vector.load %arg6[%c0_36, %c0_37] : memref<1x1xf32, #tpu.memory_space<vmem>>, vector<1x1xf32>
      tpu.vector_store %arg6[%c0_36, %c0_37], %72 {strides = array<i32>} : memref<1x1xf32, #tpu.memory_space<vmem>>, vector<1x1xf32>,
    } else {
    }
    %c8_i32 = arith.constant 8 : i32
    %3 = arith.muli %arg0, %c8_i32 : i32
    %4 = tpu.assume_multiple %3, 8 : i32
    %5 = arith.index_cast %4 : i32 to index
    %c0 = arith.constant 0 : index
    %6 = vector.load %arg1[%5, %c0] : memref<16x32xbf16, #tpu.memory_space<vmem>>, vector<8x32xbf16>
    %c8_i32_1 = arith.constant 8 : i32
    %7 = arith.cmpi slt, %4, %c8_i32_1 : i32
    %c8_i32_2 = arith.constant 8 : i32
    %8 = arith.addi %4, %c8_i32_2 : i32
    %c8_i32_3 = arith.constant 8 : i32
    %9 = arith.subi %4, %c8_i32_3 : i32
    %10 = arith.select %7, %8, %9 : i32
    %11 = tpu.assume_multiple %10, 8 : i32
    %12 = arith.index_cast %11 : i32 to index
    %c0_4 = arith.constant 0 : index
    %13 = vector.load %arg1[%12, %c0_4] : memref<16x32xbf16, #tpu.memory_space<vmem>>, vector<8x32xbf16>
    %c0_5 = arith.constant 0 : index
    %c0_6 = arith.constant 0 : index
    %14 = vector.load %arg1[%c0_5, %c0_6] : memref<16x32xbf16, #tpu.memory_space<vmem>>, vector<16x32xbf16>
    %cst = arith.constant dense<0.000000e+00> : vector<8x16xf32>
    %15 = tpu.matmul %6, %14, %cst {dimension_numbers = #tpu.dot_dimension_numbers<[1], [1], [0], [0], [0, 0, 1, 0], [], []>} : vector<8x32xbf16>, vector<16x32xbf16>, vector<8x16xf32> -> vector<8x16xf32>
    %cst_7 = arith.constant 1.000000e+00 : f32
    %16 = vector.broadcast %cst_7 : f32 to vector<8x16xf32>
    %17 = arith.mulf %15, %16 : vector<8x16xf32>
    %cst_8 = arith.constant 1.000000e+00 : f32
    %18 = vector.broadcast %cst_8 : f32 to vector<8x16xf32>
    %19 = arith.subf %17, %18 : vector<8x16xf32>
    %20 = math.exp %19 : vector<8x16xf32>
    %cst_9 = arith.constant dense<0.000000e+00> : vector<8xf32>
    %21 = vector.multi_reduction <add>, %20, %cst_9 [1] : vector<8x16xf32> to vector<8xf32>
    %22 = vector.shape_cast %21 : vector<8xf32> to vector<8x1xf32>
    %cst_10 = arith.constant 1.000000e+00 : f32
    %23 = vector.broadcast %cst_10 : f32 to vector<8x1xf32>
    %24 = arith.subf %22, %23 : vector<8x1xf32>
    %25 = math.log %24 : vector<8x1xf32>
    %cst_11 = arith.constant 1.000000e+00 : f32
    %26 = vector.broadcast %cst_11 : f32 to vector<8x1xf32>
    %27 = arith.addf %26, %25 : vector<8x1xf32>
    %28 = arith.extf %6 : vector<8x32xbf16> to vector<8x32xf32>
    %29 = arith.extf %13 : vector<8x32xbf16> to vector<8x32xf32>
    %30 = arith.mulf %28, %29 : vector<8x32xf32>
    %cst_12 = arith.constant dense<0.000000e+00> : vector<8xf32>
    %31 = vector.multi_reduction <add>, %30, %cst_12 [1] : vector<8x32xf32> to vector<8xf32>
    %32 = vector.shape_cast %31 : vector<8xf32> to vector<8x1xf32>
    %cst_13 = arith.constant 1.000000e+00 : f32
    %33 = vector.broadcast %cst_13 : f32 to vector<8x1xf32>
    %34 = arith.mulf %32, %33 : vector<8x1xf32>
    %c0_14 = arith.constant 0 : index
    %c0_15 = arith.constant 0 : index
    %35 = vector.load %arg5[%c0_14, %c0_15] : memref<1x1xf32, #tpu.memory_space<vmem>>, vector<1x1xf32>
    %36 = arith.subf %27, %34 : vector<8x1xf32>
    %37 = vector.shape_cast %36 : vector<8x1xf32> to vector<1x8x1xf32>
    %cst_16 = arith.constant dense<0.000000e+00> : vector<1xf32>
    %38 = vector.multi_reduction <add>, %37, %cst_16 [1, 2] : vector<1x8x1xf32> to vector<1xf32>
    %39 = vector.shape_cast %38 : vector<1xf32> to vector<1x1x1xf32>
    %40 = vector.extract %39[0, 0, 0] : f32 from vector<1x1x1xf32>
    %41 = vector.broadcast %40 : f32 to vector<1x1xf32>
    %42 = arith.addf %35, %41 : vector<1x1xf32>
    %c0_17 = arith.constant 0 : index
    %c0_18 = arith.constant 0 : index
    %43 = vector.load %arg5[%c0_17, %c0_18] : memref<1x1xf32, #tpu.memory_space<vmem>>, vector<1x1xf32>
    tpu.vector_store %arg5[%c0_17, %c0_18], %42 {strides = array<i32>} : memref<1x1xf32, #tpu.memory_space<vmem>>, vector<1x1xf32>,
    %c0_19 = arith.constant 0 : index
    %c0_20 = arith.constant 0 : index
    %44 = vector.load %arg2[%c0_19, %c0_20] : memref<8x4xf32, #tpu.memory_space<vmem>>, vector<8x4xf32>
    %c0_21 = arith.constant 0 : index
    %c0_22 = arith.constant 0 : index
    %45 = vector.load %arg3[%c0_21, %c0_22] : memref<8x4xf32, #tpu.memory_space<vmem>>, vector<8x4xf32>
    %46 = arith.mulf %44, %45 : vector<8x4xf32>
    %cst_23 = arith.constant dense<0.000000e+00> : vector<8xf32>
    %47 = vector.multi_reduction <add>, %46, %cst_23 [1] : vector<8x4xf32> to vector<8xf32>
    %48 = vector.shape_cast %47 : vector<8xf32> to vector<8x1xf32>
    %cst_24 = arith.constant dense<0xFF800000> : vector<8xf32>
    %49 = vector.multi_reduction <maximumf>, %44, %cst_24 [1] : vector<8x4xf32> to vector<8xf32>
    %50 = vector.shape_cast %49 : vector<8xf32> to vector<8x1xf32>
    %51 = vector.broadcast %50 : vector<8x1xf32> to vector<8x4xf32>
    %52 = arith.subf %44, %51 : vector<8x4xf32>
    %53 = math.exp %52 : vector<8x4xf32>
    %cst_25 = arith.constant dense<0.000000e+00> : vector<8xf32>
    %54 = vector.multi_reduction <add>, %53, %cst_25 [1] : vector<8x4xf32> to vector<8xf32>
    %55 = vector.shape_cast %54 : vector<8xf32> to vector<8x1xf32>
    %56 = math.log %55 : vector<8x1xf32>
    %57 = arith.addf %50, %56 : vector<8x1xf32>
    %c0_26 = arith.constant 0 : index
    %c0_27 = arith.constant 0 : index
    %58 = vector.load %arg6[%c0_26, %c0_27] : memref<1x1xf32, #tpu.memory_space<vmem>>, vector<1x1xf32>
    %59 = arith.subf %57, %48 : vector<8x1xf32>
    %60 = vector.shape_cast %59 : vector<8x1xf32> to vector<1x8x1xf32>
    %cst_28 = arith.constant dense<0.000000e+00> : vector<1xf32>
    %61 = vector.multi_reduction <add>, %60, %cst_28 [1, 2] : vector<1x8x1xf32> to vector<1xf32>
    %62 = vector.shape_cast %61 : vector<1xf32> to vector<1x1x1xf32>
    %63 = vector.extract %62[0, 0, 0] : f32 from vector<1x1x1xf32>
    %64 = vector.broadcast %63 : f32 to vector<1x1xf32>
    %65 = arith.addf %58, %64 : vector<1x1xf32>
    %c0_29 = arith.constant 0 : index
    %c0_30 = arith.constant 0 : index
    %66 = vector.load %arg6[%c0_29, %c0_30] : memref<1x1xf32, #tpu.memory_space<vmem>>, vector<1x1xf32>
    tpu.vector_store %arg6[%c0_29, %c0_30], %65 {strides = array<i32>} : memref<1x1xf32, #tpu.memory_space<vmem>>, vector<1x1xf32>,
    %c1_i32 = arith.constant 1 : i32
    %67 = arith.cmpi eq, %arg0, %c1_i32 : i32
    %68 = arith.extui %67 : i1 to i32
    %c0_i32_31 = arith.constant 0 : i32
    %69 = arith.cmpi ne, %68, %c0_i32_31 : i32
    scf.if %69 {
      %c0_32 = arith.constant 0 : index
      %c0_33 = arith.constant 0 : index
      %70 = vector.load %arg5[%c0_32, %c0_33] : memref<1x1xf32, #tpu.memory_space<vmem>>, vector<1x1xf32>
      %cst_34 = arith.constant 6.250000e-02 : f32
      %71 = vector.broadcast %cst_34 : f32 to vector<1x1xf32>
      %72 = arith.mulf %70, %71 : vector<1x1xf32>
      %c0_35 = arith.constant 0 : index
      %c0_36 = arith.constant 0 : index
      %73 = vector.load %arg6[%c0_35, %c0_36] : memref<1x1xf32, #tpu.memory_space<vmem>>, vector<1x1xf32>
      %cst_37 = arith.constant 6.250000e-02 : f32
      %74 = vector.broadcast %cst_37 : f32 to vector<1x1xf32>
      %75 = arith.mulf %73, %74 : vector<1x1xf32>
      %cst_38 = arith.constant 1.000000e+00 : f32
      %76 = vector.broadcast %cst_38 : f32 to vector<1x1xf32>
      %77 = arith.mulf %76, %72 : vector<1x1xf32>
      %cst_39 = arith.constant 1.000000e+00 : f32
      %78 = vector.broadcast %cst_39 : f32 to vector<1x1xf32>
      %79 = arith.mulf %78, %75 : vector<1x1xf32>
      %80 = arith.addf %77, %79 : vector<1x1xf32>
      %81 = tpu.concatenate %80, %72, %75 in 1 : vector<1x1xf32>, vector<1x1xf32>, vector<1x1xf32> -> vector<1x3xf32>
      %c0_40 = arith.constant 0 : index
      %c0_41 = arith.constant 0 : index
      %82 = vector.load %arg4[%c0_40, %c0_41] : memref<1x3xf32, #tpu.memory_space<vmem>>, vector<1x3xf32>
      tpu.vector_store %arg4[%c0_40, %c0_41], %81 {strides = array<i32>} : memref<1x3xf32, #tpu.memory_space<vmem>>, vector<1x3xf32>,
    } else {
    }
    return
  }
  func.func @transform_0(%arg0: i32) -> (i32, i32) {
    %c0_i32 = arith.constant 0 : i32
    %c0_i32_0 = arith.constant 0 : i32
    %c0_i32_1 = arith.constant 0 : i32
    return %c0_i32, %c0_i32_0 : i32, i32
  }
  func.func @transform_1(%arg0: i32) -> (i32, i32) {
    %c0_i32 = arith.constant 0 : i32
    %c0_i32_0 = arith.constant 0 : i32
    return %arg0, %c0_i32 : i32, i32
  }
  func.func @transform_2(%arg0: i32) -> (i32, i32) {
    %c0_i32 = arith.constant 0 : i32
    %c0_i32_0 = arith.constant 0 : i32
    return %arg0, %c0_i32 : i32, i32
  }
  func.func @transform_3(%arg0: i32) -> (i32, i32) {
    %c0_i32 = arith.constant 0 : i32
    %c0_i32_0 = arith.constant 0 : i32
    %c0_i32_1 = arith.constant 0 : i32
    return %c0_i32, %c0_i32_0 : i32, i32
  }
}

</mosaic_0001>

<llo_original>
// kernel: tpu_custom_call.1
$region0: #{tpu_custom_call.1}
  #allocation0 [shape = 'u32[]', space=smem, size = 0x4, offset = 0x4, fixed_abs, tag = 'smem constant byte address 0x4 - core index']
  #allocation1 [shape = 'u32[72,128]{1,0:T(1,128)}', space=vmem, size = 0x9000, scoped, tag = 'internal scratch']
  #allocation2 [shape = 'f32[1,1]{1,0:T(1,128)}', space=vmem, size = 0x200, scoped, tag = 'scratch operand']
  #allocation3 [shape = 'f32[1,1]{1,0:T(1,128)}', space=vmem, size = 0x200, scoped, tag = 'scratch operand']
  %s0 = inlined_call_operand.vmem [shape: bf16[16,32], index: 0, kind: input, shape index: {}]
  %s1 = inlined_call_operand.vmem [shape: f32[16,4], index: 1, kind: input, shape index: {}]
  %s2 = inlined_call_operand.vmem [shape: f32[16,4], index: 2, kind: input, shape index: {}]
  %s3 = inlined_call_operand.hbm [shape: f32[1,3], index: 3, kind: output, shape index: {}]
  %s4 = sld [smem:[#allocation0]]
  $region53: #{tpu_custom_call.1} parent=0
    _
  %s6 = ssub.s32 1, %s4
  %s7 = scalar_select 0, %s6, %s4
  $region1: #{tpu_custom_call.1} parent=0
    #allocation4 [shape = 'u8[512]{0}', space=vmem, size = 0x400, scoped, tag = 'output window, operand 0, single buffered']
    #allocation5 [shape = 's32[2]{0}', space=sflag, size = 0x8, scoped, tag = 'scoped memory for tpu_custom_call.1']
    %8 = vsyncpa [#allocation5], 0
    loop: start=0, step=1, limit=4
    $region2: #{tpu_custom_call.1} parent=1 // loop_pre_header
      _
    $region3: #{tpu_custom_call.1} parent=1 // loop_header
      %s10 = sphi 0, %s14
      %p11 = scmp.ge.s32.totalorder %s10, 4
      %s18 = sphi 0, %s18
      %s20 = sphi 0, %s18
      %s21 = sphi 0, %s20
      %s35 = sphi 0, %s21
      %s41 = sphi 0, %s43
      %s44 = sphi 0, %s41
      %s45 = sphi 0, %s44
      %s61 = sphi 0, %s45
      %s67 = sphi 0, %s69
      %s70 = sphi 0, %s67
      %s71 = sphi 0, %s70
      %s87 = sphi 0, %s71
      %s91 = sphi 0, %s91
      %s93 = sphi 0, %s91
      %s94 = sphi 0, %s93
      %s108 = sphi 0, %s94
    $region4: #{tpu_custom_call.1} parent=1 // loop_header_branch
      %13 = sbr.rel (%p11) target = $region8
    $region5: #{tpu_custom_call.1} parent=1 // loop_body
      %s15 = ssub.s32 %s10, 1
      %s16 = ssub.s32 %s10, 2
      %s17 = sadd.s32 %s10, 1
      %s19 = sadd.s32 %s18, 1
      %p22 = scmp.eq.s32.totalorder %s10, 1
      %p23 = scmp.ne.s32.totalorder %s18, %s20
      %p24 = scmp.eq.s32.totalorder %s10, 0
      %p25 = por %p23, %p24
      %p26 = scmp.ne.s32.totalorder %s18, %s20
      %p27 = scmp.eq.s32.totalorder %s15, 1
      %p28 = por %p26, %p27
      %p29 = scmp.ne.s32.totalorder %s20, %s21
      %p30 = scmp.eq.s32.totalorder %s15, 0
      %p31 = por %p29, %p30
      %p32 = scmp.ne.s32.totalorder %s20, %s21
      %p33 = scmp.eq.s32.totalorder %s16, 1
      %p34 = por %p32, %p33
      %p36 = scmp.ne.s32.totalorder %s21, %s35
      %p37 = scmp.eq.s32.totalorder %s16, 0
      %p38 = por %p36, %p37
      %s39 = ssub.s32 %s10, %s17
      %p40 = scmp.eq.s32.totalorder %s39, 0
      %s42 = sadd.s32 %s41, 1
      %s43 = scalar_select %p40, %s41, %s42
      %p46 = pneg %p40
      %p47 = scmp.eq.s32.totalorder %s10, 1
      %p48 = por %p46, %p47
      %p49 = scmp.ne.s32.totalorder %s41, %s44
      %p50 = scmp.eq.s32.totalorder %s10, 0
      %p51 = por %p49, %p50
      %p52 = scmp.ne.s32.totalorder %s41, %s44
      %p53 = scmp.eq.s32.totalorder %s15, 1
      %p54 = por %p52, %p53
      %p55 = scmp.ne.s32.totalorder %s44, %s45
      %p56 = scmp.eq.s32.totalorder %s15, 0
      %p57 = por %p55, %p56
      %p58 = scmp.ne.s32.totalorder %s44, %s45
      %p59 = scmp.eq.s32.totalorder %s16, 1
      %p60 = por %p58, %p59
      %p62 = scmp.ne.s32.totalorder %s45, %s61
      %p63 = scmp.eq.s32.totalorder %s16, 0
      %p64 = por %p62, %p63
      %s65 = ssub.s32 %s10, %s17
      %p66 = scmp.eq.s32.totalorder %s65, 0
      %s68 = sadd.s32 %s67, 1
      %s69 = scalar_select %p66, %s67, %s68
      %p72 = pneg %p66
      %p73 = scmp.eq.s32.totalorder %s10, 1
      %p74 = por %p72, %p73
      %p75 = scmp.ne.s32.totalorder %s67, %s70
      %p76 = scmp.eq.s32.totalorder %s10, 0
      %p77 = por %p75, %p76
      %p78 = scmp.ne.s32.totalorder %s67, %s70
      %p79 = scmp.eq.s32.totalorder %s15, 1
      %p80 = por %p78, %p79
      %p81 = scmp.ne.s32.totalorder %s70, %s71
      %p82 = scmp.eq.s32.totalorder %s15, 0
      %p83 = por %p81, %p82
      %p84 = scmp.ne.s32.totalorder %s70, %s71
      %p85 = scmp.eq.s32.totalorder %s16, 1
      %p86 = por %p84, %p85
      %p88 = scmp.ne.s32.totalorder %s71, %s87
      %p89 = scmp.eq.s32.totalorder %s16, 0
      %p90 = por %p88, %p89
      %s92 = sadd.s32 %s91, 1
      %p95 = scmp.eq.s32.totalorder %s10, 1
      %p96 = scmp.ne.s32.totalorder %s91, %s93
      %p97 = scmp.eq.s32.totalorder %s10, 0
      %p98 = por %p96, %p97
      %p99 = scmp.ne.s32.totalorder %s91, %s93
      %p100 = scmp.eq.s32.totalorder %s15, 1
      %p101 = por %p99, %p100
      %p102 = scmp.ne.s32.totalorder %s93, %s94
      %p103 = scmp.eq.s32.totalorder %s15, 0
      %p104 = por %p102, %p103
      %p105 = scmp.ne.s32.totalorder %s93, %s94
      %p106 = scmp.eq.s32.totalorder %s16, 1
      %p107 = por %p105, %p106
      %p109 = scmp.ne.s32.totalorder %s94, %s108
      %p110 = scmp.eq.s32.totalorder %s16, 0
      %p111 = por %p109, %p110
      %p112 = scmp.le.s32.totalorder 1, %s10
      %p113 = scmp.lt.s32.totalorder %s10, 3
      %p114 = pnand %p112, %p113
      %p115 = pneg %p114
      // Predicated region
      $region9: #{tpu_custom_call.1} parent=5 // pred_check
        _
      $region10: #{tpu_custom_call.1} parent=5 // pred_check_branch
        %117 = sbr.rel (%p114) target = $region12
      $region11: #{tpu_custom_call.1} parent=5 // pred_region
        %s118 = ssub.s32 %s10, 1
        // Predicated region
        $region13: #{tpu_custom_call.1} parent=11 // pred_check
          %p119 = pneg %p31
        $region14: #{tpu_custom_call.1} parent=11 // pred_check_branch
          %121 = sbr.rel (%p119) target = $region16
        $region15: #{tpu_custom_call.1} parent=11 // pred_region
          _
        $region16: #{tpu_custom_call.1} parent=11 // pred_fallthru
          _
      $region12: #{tpu_custom_call.1} parent=5 // pred_fallthru
        _
      %p122 = scmp.lt.s32.totalorder %s10, 2
      // Predicated region
      $region17: #{tpu_custom_call.1} parent=5 // pred_check
        %p123 = pneg %p122
      $region18: #{tpu_custom_call.1} parent=5 // pred_check_branch
        %125 = sbr.rel (%p123) target = $region20
      $region19: #{tpu_custom_call.1} parent=5 // pred_region
        // Predicated region
        $region21: #{tpu_custom_call.1} parent=19 // pred_check
          %p126 = pneg %p51
        $region22: #{tpu_custom_call.1} parent=19 // pred_check_branch
          %128 = sbr.rel (%p126) target = $region24
        $region23: #{tpu_custom_call.1} parent=19 // pred_region
          %p129 = scmp.lt.s32.totalorder %s10, 1
          %s130 = scalar_select %p129, %s10, 1
          %s131 = smul.addr %s130, 8
          %s132 = scalar_lea.vmem %s1, %s131
        $region24: #{tpu_custom_call.1} parent=19 // pred_fallthru
          _
        // Predicated region
        $region25: #{tpu_custom_call.1} parent=19 // pred_check
          %p133 = pneg %p77
        $region26: #{tpu_custom_call.1} parent=19 // pred_check_branch
          %135 = sbr.rel (%p133) target = $region28
        $region27: #{tpu_custom_call.1} parent=19 // pred_region
          %p136 = scmp.lt.s32.totalorder %s10, 1
          %s137 = scalar_select %p136, %s10, 1
          %s138 = smul.addr %s137, 8
          %s139 = scalar_lea.vmem %s2, %s138
        $region28: #{tpu_custom_call.1} parent=19 // pred_fallthru
          _
      $region20: #{tpu_custom_call.1} parent=5 // pred_fallthru
        _
      %p140 = scmp.le.s32.totalorder 1, %s10
      %p141 = scmp.lt.s32.totalorder %s10, 3
      %p142 = pnand %p140, %p141
      %p143 = pneg %p142
      // Predicated region
      $region29: #{tpu_custom_call.1} parent=5 // pred_check
        _
      $region30: #{tpu_custom_call.1} parent=5 // pred_check_branch
        %145 = sbr.rel (%p142) target = $region32
      $region31: #{tpu_custom_call.1} parent=5 // pred_region
        %s146 = ssub.s32 %s10, 1
        %p147 = pneg %p31
        %p148 = pneg %p28
        %p149 = scmp.lt.s32.totalorder %s15, 1
        %s150 = scalar_select %p149, %s15, 1
        %s151 = smul.addr %s150, 8
        %s152 = scalar_lea.vmem %s1, %s151
        %p153 = pneg %p57
        %p154 = pneg %p54
        %p155 = scmp.lt.s32.totalorder %s15, 1
        %s156 = scalar_select %p155, %s15, 1
        %s157 = smul.addr %s156, 8
        %s158 = scalar_lea.vmem %s2, %s157
        %p159 = pneg %p83
        %p160 = pneg %p80
        %p161 = pneg %p104
        %p162 = pneg %p101
        %p163 = scmp.lt.s32.totalorder %s15, 1
        %s164 = scalar_select %p163, %s15, 1
        %s165 = smul.addr %s164, 8
        %s166 = scalar_lea.vmem %s1, %s165
        %p167 = scmp.lt.s32.totalorder %s15, 1
        %s168 = scalar_select %p167, %s15, 1
        %s169 = smul.addr %s168, 8
        %s170 = scalar_lea.vmem %s2, %s169
        %p172 = scmp.eq.s32.totalorder %s15, 0
        // Predicated region
        $region33: #{tpu_custom_call.1} parent=31 // pred_check
          %p173 = pneg %p172
        $region34: #{tpu_custom_call.1} parent=31 // pred_check_branch
          %175 = sbr.rel (%p173) target = $region36
        $region35: #{tpu_custom_call.1} parent=31 // pred_region
          %vm176 = vcmask 0
          %177 = vst.msk [vmem:[#allocation2] sm:$0x1] %vm176, 0.0
          %178 = vst.msk [vmem:[#allocation3] sm:$0x1] %vm176, 0.0
        $region36: #{tpu_custom_call.1} parent=31 // pred_fallthru
          _
        %s179 = smul.u32 %s15, 8
        %s180 = sshra.s32 %s179, 3
        %s181 = sand.u32 %s179, 7
        %s182 = smul.addr %s180, 4
        %s183 = scalar_lea.vmem %s0, %s182
        %v184 = vld [vmem:[%s183] sm:$0xf]
        %p185 = scmp.lt.s32.totalorder %s179, 8
        %s186 = sadd.s32 %s179, 8
        %s187 = ssub.s32 %s179, 8
        %s188 = scalar_select %p185, %s186, %s187
        %s189 = sshra.s32 %s188, 3
        %s190 = sand.u32 %s188, 7
        %s191 = smul.addr %s189, 4
        %s192 = scalar_lea.vmem %s0, %s191
        %v193 = vld [vmem:[%s192] sm:$0xf]
        %v194 = vld [vmem:[%s0] sm:$0xf]
        %v195 = vld [vmem:[%s0 + $0x4] sm:$0xf]
        %v198 = vunpack.c.l.b16 %v194
        %v199 = vunpack.c.l.b16 %v195
        %v200 = vpack.c.b16 %v199, %v198
        %vm201 = vcmask 261120
        %v203 = vsel %vm201, %v184, 0
        %v206 = vsel %vm201, %v200, 0
        %208 = vmatpush.bf16.xpose.msra.mxu0 0
        %209 = vmatpush.bf16.xpose.msra.mxu0 0
        %210 = vmatpush.bf16.xpose.msra.mxu0 0
        %211 = vmatpush.bf16.xpose.msra.mxu0 0
        %212 = vmatpush.bf16.xpose.msra.mxu0 0
        %213 = vmatpush.bf16.xpose.msra.mxu0 0
        %214 = vmatpush.bf16.xpose.msra.mxu0 0
        %215 = vmatpush.bf16.xpose.msra.mxu0 %v206
        %216 = vmatmul.bf16.gmra.mxu0 %v203
        %v217 = vpop.f32.mrf.mxu0
        %v218 = vadd.f32 0.0, %v217
        %v219 = vpop.f32.mrf.mxu0
        %220 = vdwg.mxu0
        %v221 = vsub.f32 %v218, 1.0
        %v222 = vmul.f32 %v221, 1.442695
        %v223 = vpow.pop %v222
        %vm224 = vcmask 130048
        %v225 = vsel %vm224, %v223, 0.0
        %226 = vadd.xlane.f32.xlu0 %v225
        %v227 = vpop.xlane.xlu0 %226
        %v228 = vsub.f32 %v227, 1.0
        %v229 = vlog2.pop %v228
        %v230 = vmul.f32 %v229, 0.6931472
        %v231 = vadd.f32 %v230, 1.0
        %v232 = vunpack.c.l.bf16 %v184
        %v233 = vunpack.c.l.bf16 %v193
        %v234 = vmul.f32 %v232, %v233
        %v235 = vsel %vm201, %v234, 0.0
        %236 = vadd.xlane.f32.xlu0 %v235
        %v237 = vpop.xlane.xlu0 %236
        %v238 = vld [vmem:[#allocation2] sm:$0x1]
        %v239 = vsub.f32 %v231, %v237
        %vm240 = vcmask 7168
        %v241 = vsel %vm240, %v239, 0.0
        %242 = vadd.xlane.f32.xlu0 %v241
        %v243 = vpop.xlane.xlu0 %242
        %v244 = vrot.slane %v243, 4
        %v245 = vadd.f32 %v243, %v244
        %v246 = vrot.slane %v245, 2
        %v247 = vadd.f32 %v245, %v246
        %v248 = vrot.slane %v247, 1
        %v249 = vadd.f32 %v247, %v248
        %s250 = vtos %v249
        %v251 = vstv %s250
        %v252 = vadd.f32 %v238, %v251
        %vm253 = vcmask 0
        %254 = vst.msk [vmem:[#allocation2] sm:$0x1] %vm253, %v252
        %v255 = vld [vmem:[%s166] sm:$0xff]
        %v256 = vld [vmem:[%s170] sm:$0xff]
        %v257 = vmul.f32 %v255, %v256
        %vm258 = vcmask 31744
        %v259 = vsel %vm258, %v257, 0.0
        %260 = vadd.xlane.f32.xlu0 %v259
        %v261 = vpop.xlane.xlu0 %260
        %v262 = vsel %vm258, %v255, -inf
        %263 = vmax.xlane.f32.xlu0 %v262
        %v264 = vpop.xlane.xlu0 %263
        %v265 = vsub.f32 %v255, %v264
        %v266 = vmul.f32 %v265, 1.442695
        %v267 = vpow.pop %v266
        %v268 = vsel %vm258, %v267, 0.0
        %269 = vadd.xlane.f32.xlu0 %v268
        %v270 = vpop.xlane.xlu0 %269
        %v271 = vlog2.pop %v270
        %v272 = vmul.f32 %v271, 0.6931472
        %v273 = vadd.f32 %v264, %v272
        %v274 = vld [vmem:[#allocation3] sm:$0x1]
        %v275 = vsub.f32 %v273, %v261
        %v276 = vsel %vm240, %v275, 0.0
        %277 = vadd.xlane.f32.xlu0 %v276
        %v278 = vpop.xlane.xlu0 %277
        %v279 = vrot.slane %v278, 4
        %v280 = vadd.f32 %v278, %v279
        %v281 = vrot.slane %v280, 2
        %v282 = vadd.f32 %v280, %v281
        %v283 = vrot.slane %v282, 1
        %v284 = vadd.f32 %v282, %v283
        %s285 = vtos %v284
        %v286 = vstv %s285
        %v287 = vadd.f32 %v274, %v286
        %288 = vst.msk [vmem:[#allocation3] sm:$0x1] %vm253, %v287
        %p289 = scmp.eq.s32.totalorder %s15, 1
        // Predicated region
        $region37: #{tpu_custom_call.1} parent=31 // pred_check
          %p290 = pneg %p289
        $region38: #{tpu_custom_call.1} parent=31 // pred_check_branch
          %292 = sbr.rel (%p290) target = $region40
        $region39: #{tpu_custom_call.1} parent=31 // pred_region
          %v293 = vld [vmem:[#allocation2] sm:$0x1]
          %v294 = vmul.f32 %v293, 0.0625
          %v295 = vld [vmem:[#allocation3] sm:$0x1]
          %v296 = vmul.f32 %v295, 0.0625
          %v297 = vadd.f32 %v294, %v296
          %v299 = vperm.slane %v294, 0
          %300 = vrot.lane.b32.xlu0 %v299, 1
          %v301 = vpop.permute.xlu0 %300
          %v304 = vperm.slane %v296, 0
          %305 = vrot.lane.b32.xlu0 %v304, 2
          %v306 = vpop.permute.xlu0 %305
          %v308 = vsel %vm240, %v297, %v301
          %vm309 = vcmask 15360
          %v310 = vsel %vm309, %v308, %v306
          %vm311 = vcmask 16384
          %312 = vst.msk [vmem:[#allocation4] sm:$0x1] %vm311, %v310
        $region40: #{tpu_custom_call.1} parent=31 // pred_fallthru
          _
        // Predicated region
        $region41: #{tpu_custom_call.1} parent=31 // pred_check
          %p313 = pneg %p101
        $region42: #{tpu_custom_call.1} parent=31 // pred_check_branch
          %315 = sbr.rel (%p313) target = $region44
        $region43: #{tpu_custom_call.1} parent=31 // pred_region
          %317 = vsyncadd [#allocation5], 0
          %s319 = sshll.u32 [#allocation4], 4
          %s320 = int_to_ptr.vmem [resolvable:$true] %s319
          %s321 = sshll.u32 %s3, 4
          %s322 = int_to_ptr.hbm [resolvable:$true] %s321
          %324 = dma.vmem_to_hbm [thread:$0]  %s320, 16, %s322, [#allocation5]
        $region44: #{tpu_custom_call.1} parent=31 // pred_fallthru
          _
        // Predicated region
        $region45: #{tpu_custom_call.1} parent=31 // pred_check
          %p325 = pneg %p101
        $region46: #{tpu_custom_call.1} parent=31 // pred_check_branch
          %327 = sbr.rel (%p325) target = $region48
        $region47: #{tpu_custom_call.1} parent=31 // pred_region
          %329 = dma.done [#allocation5], 16
        $region48: #{tpu_custom_call.1} parent=31 // pred_fallthru
          _
      $region32: #{tpu_custom_call.1} parent=5 // pred_fallthru
        _
      %p330 = scmp.le.s32.totalorder 2, %s10
      // Predicated region
      $region49: #{tpu_custom_call.1} parent=5 // pred_check
        %p331 = pneg %p330
      $region50: #{tpu_custom_call.1} parent=5 // pred_check_branch
        %333 = sbr.rel (%p331) target = $region52
      $region51: #{tpu_custom_call.1} parent=5 // pred_region
        %s334 = ssub.s32 %s10, 2
      $region52: #{tpu_custom_call.1} parent=5 // pred_fallthru
        _
    $region6: #{tpu_custom_call.1} parent=1 // loop_footer
      %s14 = sadd.s32 1, %s10
    $region7: #{tpu_custom_call.1} parent=1 // loop_footer_branch
      %9 = sbr.rel target = $region3
    $region8: #{tpu_custom_call.1} parent=1 // loop_exit
      _
    %335 = vsyncpa [#allocation5], 1
    %s336 = scalar_lea.sflag [#allocation5], 1
    %337 = vsyncpa %s336, 1

</llo_original>
